<compile_context>
chip_gen: v7x
topology: tpu7x:2x2x1
jax: 0.10.0
libtpu: 0.0.40
codegen_flags: <defaults>
</compile_context>

<pallas_src>
import jax
import jax.numpy as jnp
import numpy as np
from jax import lax
from jax.experimental import pallas as pl
from jax.experimental.pallas import tpu as pltpu

# ---- synthetic "args" of ENC_turbofy_rate2_CNN ----
BATCH = 2
BLOCK_LEN = 16          # sequence length L
CODE_RATE_K = 1         # args.code_rate_k   (input channels)
ENC_NUM_UNIT = 32       # args.enc_num_unit  (hidden channels)
KERNEL_SIZE = 5         # args.dec_kernel_size
ENC_NUM_LAYER = 2       # args.enc_num_layer (kernel below hard-codes 2 layers)
# args.enc_act == 'elu' (TurboAE default); eval mode, no precomputed norm
# stats, test_channel_mode != 'block_norm_ste' -> no STE quantize on this path.


def _elu(v):
    # F.elu(x) = x if x > 0 else exp(x) - 1   (alpha = 1)
    return jnp.where(v > 0, v, jnp.exp(jnp.minimum(v, 0.0)) - 1.0)


def make_kernel(L, ks, pad, in_lanes, lanes, nc,
                off_w0, off_b0, off_w1, off_b1, off_wl, off_bl):
    """Kernel over the (L, B*2K) input and a single packed (rows, B*2C) slab."""

    def kernel(x_ref, p_ref, out_ref):
        # ---- boundary masks for the shifted taps: built once, reused ----
        pos = lax.broadcasted_iota(jnp.int32, (L, lanes), 0)
        masks = {}
        for d in range(-pad, pad + 1):
            if d == 0:
                continue
            valid = jnp.logical_and(pos >= -d, pos < L - d)
            masks[d] = valid.astype(jnp.float32)

        # inputs = 2*inputs - 1  (kept in-kernel)
        h0 = 2.0 * x_ref[...] - 1.0                       # (L, in_lanes)
        # hoisted lane-broadcasts of the few input channels (once, not per tap)
        cols = [jnp.broadcast_to(h0[:, j:j + 1], (L, lanes))
                for j in range(in_lanes)]

        # ---- layer 0: tiny cin -> VPU outer products; acc starts at bias ----
        acc = p_ref[pl.ds(off_b0, 1), :]                  # (1, lanes) bias row
        for t in range(ks):                               # static unrolled taps
            d = t - pad
            tap = None
            for j in range(in_lanes):
                # full 128-lane weight row (zeros outside this batch/branch)
                w = p_ref[pl.ds(off_w0 + (t * in_lanes + j) * 8, 1), :]
                term = cols[j] * w                        # sublane-bcast weight
                tap = term if tap is None else tap + term
            if d != 0:
                # weight rows are sublane-constant -> roll after weighting:
                # one XLU rotate + one mask multiply per tap.
                tap = pltpu.roll(tap, (-d) % L, axis=0) * masks[d]
            acc = acc + tap
        h1 = _elu(acc)                                    # (L, lanes)

        # ---- layer 1: fuse the ks tap dots into ONE wide-K MXU matmul ----
        pieces = []
        for t in range(ks):
            d = t - pad
            if d == 0:
                pieces.append(h1)
            else:
                pieces.append(pltpu.roll(h1, (-d) % L, axis=0) * masks[d])
        x_im2col = jnp.concatenate(pieces, axis=1)        # (L, ks*lanes)
        w1_all = p_ref[pl.ds(off_w1, ks * lanes), :]      # (ks*lanes, lanes)
        h2 = _elu(jnp.dot(x_im2col, w1_all,
                          preferred_element_type=jnp.float32)
                  + p_ref[pl.ds(off_b1, 1), :])

        # ---- fused final Linear; slice live columns BEFORE the ELU ----
        wl = p_ref[pl.ds(off_wl, lanes), :]               # (lanes, lanes)
        y = jnp.dot(h2, wl, preferred_element_type=jnp.float32) \
            + p_ref[pl.ds(off_bl, 1), :]
        codes = _elu(y[:, 0:nc])                          # (L, 2B) live codes

        # ---- power constraint: one-pass mean / unbiased (n-1) variance ----
        n = codes.size
        s = jnp.sum(codes)
        ss = jnp.sum(codes * codes)
        mean = s / n
        var = (ss - n * mean * mean) / (n - 1)
        out_ref[...] = (codes - mean) * lax.rsqrt(var)    # single store

    return kernel


def _block_diag(a, b):
    a = a.astype(jnp.float32)
    b = b.astype(jnp.float32)
    za = jnp.zeros((a.shape[0], b.shape[1]), jnp.float32)
    zb = jnp.zeros((b.shape[0], a.shape[1]), jnp.float32)
    return jnp.concatenate(
        [jnp.concatenate([a, za], axis=1),
         jnp.concatenate([zb, b], axis=1)], axis=0)


def _pad_rows(a, rows):
    return jnp.pad(a, ((0, rows - a.shape[0]), (0, 0)))


def enc_turbofy_rate2_cnn(x, p_array, params):
    B, L, K = x.shape
    ks, _, C = params["w1"][0].shape
    pad = ks // 2
    in_lanes = B * 2 * K          # fused input channels (batch folded into lanes)
    lanes = B * 2 * C             # fused hidden channels (= 128 for B=2, C=32)
    nc = 2 * B                    # live output columns [sys_b, p2_b per batch]

    eye_b = jnp.eye(B, dtype=jnp.float32)

    # static, sublane-aligned row offsets inside the packed parameter slab
    off_w0 = 0                                    # ks*in_lanes slots of 8 rows
    off_b0 = off_w0 + ks * in_lanes * 8
    off_w1 = off_b0 + 8
    off_b1 = off_w1 + ks * lanes
    off_wl = off_b1 + 8
    off_bl = off_wl + lanes

    # --- one contiguous f32 slab (single HBM->VMEM DMA) ---
    segs = []
    # layer-0 weight rows: one 8-row-aligned slot per (tap, input lane)
    for t in range(ks):
        w0t = jnp.kron(eye_b,
                       _block_diag(params["w1"][0][t], params["w2"][0][t]))
        for j in range(in_lanes):
            segs.append(_pad_rows(w0t[j:j + 1, :], 8))
    b0 = jnp.tile(jnp.concatenate([params["b1"][0], params["b2"][0]], axis=1),
                  (1, B)).astype(jnp.float32)
    segs.append(_pad_rows(b0, 8))
    # layer-1 weights stacked in tap order for the single wide-K matmul
    for t in range(ks):
        segs.append(jnp.kron(eye_b,
                             _block_diag(params["w1"][1][t], params["w2"][1][t])))
    b1 = jnp.tile(jnp.concatenate([params["b1"][1], params["b2"][1]], axis=1),
                  (1, B)).astype(jnp.float32)
    segs.append(_pad_rows(b1, 8))
    # fused final Linear (columns >= nc are exact zeros) + its bias
    wl = jnp.kron(eye_b, _block_diag(params["wl1"], params["wl2"]))   # (lanes,nc)
    segs.append(jnp.pad(wl, ((0, 0), (0, lanes - nc))))
    bl = jnp.tile(jnp.concatenate([params["bl1"], params["bl2"]], axis=1),
                  (1, B)).astype(jnp.float32)
    segs.append(_pad_rows(jnp.pad(bl, ((0, 0), (0, lanes - nc))), 8))
    slab = jnp.concatenate(segs, axis=0)

    # TODO(synk): the Interleaver gather + channel concat + final (L,B,2)
    # transpose stay in the JAX wrapper (pure index/layout glue feeding one
    # fused (L, B*2K) input DMA).
    x_cat = jnp.concatenate([x, x[:, p_array, :]], axis=-1)          # (B, L, 2K)
    x_in = jnp.transpose(x_cat, (1, 0, 2)).reshape(L, in_lanes)
    x_in = x_in.astype(jnp.float32)

    kernel = make_kernel(L, ks, pad, in_lanes, lanes, nc,
                         off_w0, off_b0, off_w1, off_b1, off_wl, off_bl)

    vm = pl.BlockSpec(memory_space=pltpu.MemorySpace.VMEM)
    out = pl.pallas_call(
        kernel,
        out_shape=jax.ShapeDtypeStruct((L, nc), jnp.float32),
        in_specs=[vm, vm],
        out_specs=vm,
    )(x_in, slab)
    # columns are [x_sys_b, x_p2_b] per batch -> (B, L, 2)
    return jnp.transpose(out.reshape(L, B, 2), (1, 0, 2))


# ---- pure-JAX reference (for a correctness check) ----
def ref_forward(x, p_array, params):
    def conv_branch(h, ws, bs):
        for w, b in zip(ws, bs):
            ks = w.shape[0]
            pad = ks // 2
            hp = jnp.pad(h, ((0, 0), (pad, pad), (0, 0)))
            y = sum(jnp.einsum("blc,co->blo", hp[:, t:t + h.shape[1], :], w[t])
                    for t in range(ks)) + b
            h = _elu(y)
        return h

    xin = 2.0 * x - 1.0
    xs = conv_branch(xin, params["w1"], params["b1"])
    xs = _elu(xs @ params["wl1"] + params["bl1"])
    xi = xin[:, p_array, :]
    xp = conv_branch(xi, params["w2"], params["b2"])
    xp = _elu(xp @ params["wl2"] + params["bl2"])
    xt = jnp.concatenate([xs, xp], axis=2)
    return (xt - jnp.mean(xt)) / jnp.std(xt, ddof=1)


def make_params(key, K, C, ks):
    ks_ = jax.random.split(key, 12)
    s = 0.1

    def nrm(k, shape):
        return (s * jax.random.normal(k, shape)).astype(jnp.float32)

    return {
        # conv weights stored as (ks, Cin, Cout) == torch (Cout, Cin, ks).T
        "w1": [nrm(ks_[0], (ks, K, C)), nrm(ks_[1], (ks, C, C))],
        "b1": [nrm(ks_[2], (1, C)), nrm(ks_[3], (1, C))],
        "wl1": nrm(ks_[4], (C, 1)),
        "bl1": nrm(ks_[5], (1, 1)),
        "w2": [nrm(ks_[6], (ks, K, C)), nrm(ks_[7], (ks, C, C))],
        "b2": [nrm(ks_[8], (1, C)), nrm(ks_[9], (1, C))],
        "wl2": nrm(ks_[10], (C, 1)),
        "bl2": nrm(ks_[11], (1, 1)),
    }


if __name__ == "__main__":
    key = jax.random.PRNGKey(0)
    kx, kp, kw = jax.random.split(key, 3)

    # message bits (B, L, K)
    x = jax.random.bernoulli(
        kx, 0.5, (BATCH, BLOCK_LEN, CODE_RATE_K)).astype(jnp.float32)
    # interleaver permutation p_array
    p_array = jax.random.permutation(kp, BLOCK_LEN)
    params = make_params(kw, CODE_RATE_K, ENC_NUM_UNIT, KERNEL_SIZE)

    enc = jax.jit(enc_turbofy_rate2_cnn)
    codes = jax.block_until_ready(enc(x, p_array, params))

    ref = ref_forward(x, p_array, params)
    np.testing.assert_allclose(np.asarray(codes), np.asarray(ref),
                               rtol=5e-3, atol=5e-3)
    print("KERNEL_OK")
</pallas_src>

<mosaic_0001>
module attributes {stable_mosaic.version = 11 : i64} {
  func.func @kernel(%arg0: memref<16x4xf32, #tpu.memory_space<vmem>>, %arg1: memref<952x128xf32, #tpu.memory_space<vmem>>, %arg2: memref<16x4xf32, #tpu.memory_space<vmem>>) attributes {dimension_semantics = [], scalar_prefetch = 0 : i64, scratch_operands = 0 : i64, tpu.core_type = #tpu.core_type<tc>} {
    %0 = tpu.iota {dimensions = array<i32: 0>} : vector<16x128xi32>
    %c2_i32 = arith.constant 2 : i32
    %1 = vector.broadcast %c2_i32 : i32 to vector<16x128xi32>
    %2 = arith.cmpi sge, %0, %1 : vector<16x128xi32>
    %c18_i32 = arith.constant 18 : i32
    %3 = vector.broadcast %c18_i32 : i32 to vector<16x128xi32>
    %4 = arith.cmpi slt, %0, %3 : vector<16x128xi32>
    %5 = arith.andi %2, %4 : vector<16x128xi1>
    %6 = arith.extui %5 : vector<16x128xi1> to vector<16x128xi32>
    %7 = arith.sitofp %6 : vector<16x128xi32> to vector<16x128xf32>
    %c1_i32 = arith.constant 1 : i32
    %8 = vector.broadcast %c1_i32 : i32 to vector<16x128xi32>
    %9 = arith.cmpi sge, %0, %8 : vector<16x128xi32>
    %c17_i32 = arith.constant 17 : i32
    %10 = vector.broadcast %c17_i32 : i32 to vector<16x128xi32>
    %11 = arith.cmpi slt, %0, %10 : vector<16x128xi32>
    %12 = arith.andi %9, %11 : vector<16x128xi1>
    %13 = arith.extui %12 : vector<16x128xi1> to vector<16x128xi32>
    %14 = arith.sitofp %13 : vector<16x128xi32> to vector<16x128xf32>
    %c-1_i32 = arith.constant -1 : i32
    %15 = vector.broadcast %c-1_i32 : i32 to vector<16x128xi32>
    %16 = arith.cmpi sge, %0, %15 : vector<16x128xi32>
    %c15_i32 = arith.constant 15 : i32
    %17 = vector.broadcast %c15_i32 : i32 to vector<16x128xi32>
    %18 = arith.cmpi slt, %0, %17 : vector<16x128xi32>
    %19 = arith.andi %16, %18 : vector<16x128xi1>
    %20 = arith.extui %19 : vector<16x128xi1> to vector<16x128xi32>
    %21 = arith.sitofp %20 : vector<16x128xi32> to vector<16x128xf32>
    %c-2_i32 = arith.constant -2 : i32
    %22 = vector.broadcast %c-2_i32 : i32 to vector<16x128xi32>
    %23 = arith.cmpi sge, %0, %22 : vector<16x128xi32>
    %c14_i32 = arith.constant 14 : i32
    %24 = vector.broadcast %c14_i32 : i32 to vector<16x128xi32>
    %25 = arith.cmpi slt, %0, %24 : vector<16x128xi32>
    %26 = arith.andi %23, %25 : vector<16x128xi1>
    %27 = arith.extui %26 : vector<16x128xi1> to vector<16x128xi32>
    %28 = arith.sitofp %27 : vector<16x128xi32> to vector<16x128xf32>
    %c0 = arith.constant 0 : index
    %c0_0 = arith.constant 0 : index
    %29 = vector.load %arg0[%c0, %c0_0] : memref<16x4xf32, #tpu.memory_space<vmem>>, vector<16x4xf32>
    %cst = arith.constant 2.000000e+00 : f32
    %30 = vector.broadcast %cst : f32 to vector<16x4xf32>
    %31 = arith.mulf %30, %29 : vector<16x4xf32>
    %cst_1 = arith.constant 1.000000e+00 : f32
    %32 = vector.broadcast %cst_1 : f32 to vector<16x4xf32>
    %33 = arith.subf %31, %32 : vector<16x4xf32>
    %34 = vector.extract_strided_slice %33 {offsets = [0, 0], sizes = [16, 1], strides = [1, 1]} : vector<16x4xf32> to vector<16x1xf32>
    %35 = vector.shape_cast %34 : vector<16x1xf32> to vector<16x1xf32>
    %36 = vector.broadcast %35 : vector<16x1xf32> to vector<16x128xf32>
    %37 = vector.extract_strided_slice %33 {offsets = [0, 1], sizes = [16, 1], strides = [1, 1]} : vector<16x4xf32> to vector<16x1xf32>
    %38 = vector.shape_cast %37 : vector<16x1xf32> to vector<16x1xf32>
    %39 = vector.broadcast %38 : vector<16x1xf32> to vector<16x128xf32>
    %40 = vector.extract_strided_slice %33 {offsets = [0, 2], sizes = [16, 1], strides = [1, 1]} : vector<16x4xf32> to vector<16x1xf32>
    %41 = vector.shape_cast %40 : vector<16x1xf32> to vector<16x1xf32>
    %42 = vector.broadcast %41 : vector<16x1xf32> to vector<16x128xf32>
    %43 = vector.extract_strided_slice %33 {offsets = [0, 3], sizes = [16, 1], strides = [1, 1]} : vector<16x4xf32> to vector<16x1xf32>
    %44 = vector.shape_cast %43 : vector<16x1xf32> to vector<16x1xf32>
    %45 = vector.broadcast %44 : vector<16x1xf32> to vector<16x128xf32>
    %c160 = arith.constant 160 : index
    %c0_2 = arith.constant 0 : index
    %46 = vector.load %arg1[%c160, %c0_2] : memref<952x128xf32, #tpu.memory_space<vmem>>, vector<1x128xf32>
    %c0_3 = arith.constant 0 : index
    %c0_4 = arith.constant 0 : index
    %47 = vector.load %arg1[%c0_3, %c0_4] : memref<952x128xf32, #tpu.memory_space<vmem>>, vector<1x128xf32>
    %48 = vector.broadcast %47 : vector<1x128xf32> to vector<16x128xf32>
    %49 = arith.mulf %36, %48 : vector<16x128xf32>
    %c8 = arith.constant 8 : index
    %c0_5 = arith.constant 0 : index
    %50 = vector.load %arg1[%c8, %c0_5] : memref<952x128xf32, #tpu.memory_space<vmem>>, vector<1x128xf32>
    %51 = vector.broadcast %50 : vector<1x128xf32> to vector<16x128xf32>
    %52 = arith.mulf %39, %51 : vector<16x128xf32>
    %53 = arith.addf %49, %52 : vector<16x128xf32>
    %c16 = arith.constant 16 : index
    %c0_6 = arith.constant 0 : index
    %54 = vector.load %arg1[%c16, %c0_6] : memref<952x128xf32, #tpu.memory_space<vmem>>, vector<1x128xf32>
    %55 = vector.broadcast %54 : vector<1x128xf32> to vector<16x128xf32>
    %56 = arith.mulf %42, %55 : vector<16x128xf32>
    %57 = arith.addf %53, %56 : vector<16x128xf32>
    %c24 = arith.constant 24 : index
    %c0_7 = arith.constant 0 : index
    %58 = vector.load %arg1[%c24, %c0_7] : memref<952x128xf32, #tpu.memory_space<vmem>>, vector<1x128xf32>
    %59 = vector.broadcast %58 : vector<1x128xf32> to vector<16x128xf32>
    %60 = arith.mulf %45, %59 : vector<16x128xf32>
    %61 = arith.addf %57, %60 : vector<16x128xf32>
    %c2_i32_8 = arith.constant 2 : i32
    %62 = tpu.dynamic_rotate %61 by %c2_i32_8 dim 0 : vector<16x128xf32>, i32 -> vector<16x128xf32>
    %63 = arith.mulf %62, %7 : vector<16x128xf32>
    %64 = vector.broadcast %46 : vector<1x128xf32> to vector<16x128xf32>
    %65 = arith.addf %64, %63 : vector<16x128xf32>
    %c32 = arith.constant 32 : index
    %c0_9 = arith.constant 0 : index
    %66 = vector.load %arg1[%c32, %c0_9] : memref<952x128xf32, #tpu.memory_space<vmem>>, vector<1x128xf32>
    %67 = vector.broadcast %66 : vector<1x128xf32> to vector<16x128xf32>
    %68 = arith.mulf %36, %67 : vector<16x128xf32>
    %c40 = arith.constant 40 : index
    %c0_10 = arith.constant 0 : index
    %69 = vector.load %arg1[%c40, %c0_10] : memref<952x128xf32, #tpu.memory_space<vmem>>, vector<1x128xf32>
    %70 = vector.broadcast %69 : vector<1x128xf32> to vector<16x128xf32>
    %71 = arith.mulf %39, %70 : vector<16x128xf32>
    %72 = arith.addf %68, %71 : vector<16x128xf32>
    %c48 = arith.constant 48 : index
    %c0_11 = arith.constant 0 : index
    %73 = vector.load %arg1[%c48, %c0_11] : memref<952x128xf32, #tpu.memory_space<vmem>>, vector<1x128xf32>
    %74 = vector.broadcast %73 : vector<1x128xf32> to vector<16x128xf32>
    %75 = arith.mulf %42, %74 : vector<16x128xf32>
    %76 = arith.addf %72, %75 : vector<16x128xf32>
    %c56 = arith.constant 56 : index
    %c0_12 = arith.constant 0 : index
    %77 = vector.load %arg1[%c56, %c0_12] : memref<952x128xf32, #tpu.memory_space<vmem>>, vector<1x128xf32>
    %78 = vector.broadcast %77 : vector<1x128xf32> to vector<16x128xf32>
    %79 = arith.mulf %45, %78 : vector<16x128xf32>
    %80 = arith.addf %76, %79 : vector<16x128xf32>
    %c1_i32_13 = arith.constant 1 : i32
    %81 = tpu.dynamic_rotate %80 by %c1_i32_13 dim 0 : vector<16x128xf32>, i32 -> vector<16x128xf32>
    %82 = arith.mulf %81, %14 : vector<16x128xf32>
    %83 = arith.addf %65, %82 : vector<16x128xf32>
    %c64 = arith.constant 64 : index
    %c0_14 = arith.constant 0 : index
    %84 = vector.load %arg1[%c64, %c0_14] : memref<952x128xf32, #tpu.memory_space<vmem>>, vector<1x128xf32>
    %85 = vector.broadcast %84 : vector<1x128xf32> to vector<16x128xf32>
    %86 = arith.mulf %36, %85 : vector<16x128xf32>
    %c72 = arith.constant 72 : index
    %c0_15 = arith.constant 0 : index
    %87 = vector.load %arg1[%c72, %c0_15] : memref<952x128xf32, #tpu.memory_space<vmem>>, vector<1x128xf32>
    %88 = vector.broadcast %87 : vector<1x128xf32> to vector<16x128xf32>
    %89 = arith.mulf %39, %88 : vector<16x128xf32>
    %90 = arith.addf %86, %89 : vector<16x128xf32>
    %c80 = arith.constant 80 : index
    %c0_16 = arith.constant 0 : index
    %91 = vector.load %arg1[%c80, %c0_16] : memref<952x128xf32, #tpu.memory_space<vmem>>, vector<1x128xf32>
    %92 = vector.broadcast %91 : vector<1x128xf32> to vector<16x128xf32>
    %93 = arith.mulf %42, %92 : vector<16x128xf32>
    %94 = arith.addf %90, %93 : vector<16x128xf32>
    %c88 = arith.constant 88 : index
    %c0_17 = arith.constant 0 : index
    %95 = vector.load %arg1[%c88, %c0_17] : memref<952x128xf32, #tpu.memory_space<vmem>>, vector<1x128xf32>
    %96 = vector.broadcast %95 : vector<1x128xf32> to vector<16x128xf32>
    %97 = arith.mulf %45, %96 : vector<16x128xf32>
    %98 = arith.addf %94, %97 : vector<16x128xf32>
    %99 = arith.addf %83, %98 : vector<16x128xf32>
    %c96 = arith.constant 96 : index
    %c0_18 = arith.constant 0 : index
    %100 = vector.load %arg1[%c96, %c0_18] : memref<952x128xf32, #tpu.memory_space<vmem>>, vector<1x128xf32>
    %101 = vector.broadcast %100 : vector<1x128xf32> to vector<16x128xf32>
    %102 = arith.mulf %36, %101 : vector<16x128xf32>
    %c104 = arith.constant 104 : index
    %c0_19 = arith.constant 0 : index
    %103 = vector.load %arg1[%c104, %c0_19] : memref<952x128xf32, #tpu.memory_space<vmem>>, vector<1x128xf32>
    %104 = vector.broadcast %103 : vector<1x128xf32> to vector<16x128xf32>
    %105 = arith.mulf %39, %104 : vector<16x128xf32>
    %106 = arith.addf %102, %105 : vector<16x128xf32>
    %c112 = arith.constant 112 : index
    %c0_20 = arith.constant 0 : index
    %107 = vector.load %arg1[%c112, %c0_20] : memref<952x128xf32, #tpu.memory_space<vmem>>, vector<1x128xf32>
    %108 = vector.broadcast %107 : vector<1x128xf32> to vector<16x128xf32>
    %109 = arith.mulf %42, %108 : vector<16x128xf32>
    %110 = arith.addf %106, %109 : vector<16x128xf32>
    %c120 = arith.constant 120 : index
    %c0_21 = arith.constant 0 : index
    %111 = vector.load %arg1[%c120, %c0_21] : memref<952x128xf32, #tpu.memory_space<vmem>>, vector<1x128xf32>
    %112 = vector.broadcast %111 : vector<1x128xf32> to vector<16x128xf32>
    %113 = arith.mulf %45, %112 : vector<16x128xf32>
    %114 = arith.addf %110, %113 : vector<16x128xf32>
    %c15_i32_22 = arith.constant 15 : i32
    %115 = tpu.dynamic_rotate %114 by %c15_i32_22 dim 0 : vector<16x128xf32>, i32 -> vector<16x128xf32>
    %116 = arith.mulf %115, %21 : vector<16x128xf32>
    %117 = arith.addf %99, %116 : vector<16x128xf32>
    %c128 = arith.constant 128 : index
    %c0_23 = arith.constant 0 : index
    %118 = vector.load %arg1[%c128, %c0_23] : memref<952x128xf32, #tpu.memory_space<vmem>>, vector<1x128xf32>
    %119 = vector.broadcast %118 : vector<1x128xf32> to vector<16x128xf32>
    %120 = arith.mulf %36, %119 : vector<16x128xf32>
    %c136 = arith.constant 136 : index
    %c0_24 = arith.constant 0 : index
    %121 = vector.load %arg1[%c136, %c0_24] : memref<952x128xf32, #tpu.memory_space<vmem>>, vector<1x128xf32>
    %122 = vector.broadcast %121 : vector<1x128xf32> to vector<16x128xf32>
    %123 = arith.mulf %39, %122 : vector<16x128xf32>
    %124 = arith.addf %120, %123 : vector<16x128xf32>
    %c144 = arith.constant 144 : index
    %c0_25 = arith.constant 0 : index
    %125 = vector.load %arg1[%c144, %c0_25] : memref<952x128xf32, #tpu.memory_space<vmem>>, vector<1x128xf32>
    %126 = vector.broadcast %125 : vector<1x128xf32> to vector<16x128xf32>
    %127 = arith.mulf %42, %126 : vector<16x128xf32>
    %128 = arith.addf %124, %127 : vector<16x128xf32>
    %c152 = arith.constant 152 : index
    %c0_26 = arith.constant 0 : index
    %129 = vector.load %arg1[%c152, %c0_26] : memref<952x128xf32, #tpu.memory_space<vmem>>, vector<1x128xf32>
    %130 = vector.broadcast %129 : vector<1x128xf32> to vector<16x128xf32>
    %131 = arith.mulf %45, %130 : vector<16x128xf32>
    %132 = arith.addf %128, %131 : vector<16x128xf32>
    %c14_i32_27 = arith.constant 14 : i32
    %133 = tpu.dynamic_rotate %132 by %c14_i32_27 dim 0 : vector<16x128xf32>, i32 -> vector<16x128xf32>
    %134 = arith.mulf %133, %28 : vector<16x128xf32>
    %135 = arith.addf %117, %134 : vector<16x128xf32>
    %cst_28 = arith.constant 0.000000e+00 : f32
    %136 = vector.broadcast %cst_28 : f32 to vector<16x128xf32>
    %137 = arith.cmpf ogt, %135, %136 : vector<16x128xf32>
    %cst_29 = arith.constant 0.000000e+00 : f32
    %138 = vector.broadcast %cst_29 : f32 to vector<16x128xf32>
    %139 = arith.minimumf %135, %138 : vector<16x128xf32>
    %140 = math.exp %139 : vector<16x128xf32>
    %cst_30 = arith.constant 1.000000e+00 : f32
    %141 = vector.broadcast %cst_30 : f32 to vector<16x128xf32>
    %142 = arith.subf %140, %141 : vector<16x128xf32>
    %143 = arith.select %137, %135, %142 : vector<16x128xi1>, vector<16x128xf32>
    %c2_i32_31 = arith.constant 2 : i32
    %144 = tpu.dynamic_rotate %143 by %c2_i32_31 dim 0 : vector<16x128xf32>, i32 -> vector<16x128xf32>
    %145 = arith.mulf %144, %7 : vector<16x128xf32>
    %c1_i32_32 = arith.constant 1 : i32
    %146 = tpu.dynamic_rotate %143 by %c1_i32_32 dim 0 : vector<16x128xf32>, i32 -> vector<16x128xf32>
    %147 = arith.mulf %146, %14 : vector<16x128xf32>
    %c15_i32_33 = arith.constant 15 : i32
    %148 = tpu.dynamic_rotate %143 by %c15_i32_33 dim 0 : vector<16x128xf32>, i32 -> vector<16x128xf32>
    %149 = arith.mulf %148, %21 : vector<16x128xf32>
    %c14_i32_34 = arith.constant 14 : i32
    %150 = tpu.dynamic_rotate %143 by %c14_i32_34 dim 0 : vector<16x128xf32>, i32 -> vector<16x128xf32>
    %151 = arith.mulf %150, %28 : vector<16x128xf32>
    %152 = tpu.concatenate %145, %147, %143, %149, %151 in 1 : vector<16x128xf32>, vector<16x128xf32>, vector<16x128xf32>, vector<16x128xf32>, vector<16x128xf32> -> vector<16x640xf32>
    %c168 = arith.constant 168 : index
    %c0_35 = arith.constant 0 : index
    %153 = vector.load %arg1[%c168, %c0_35] : memref<952x128xf32, #tpu.memory_space<vmem>>, vector<640x128xf32>
    %cst_36 = arith.constant dense<0.000000e+00> : vector<16x128xf32>
    %154 = tpu.matmul %152, %153, %cst_36 {dimension_numbers = #tpu.dot_dimension_numbers<[1], [0], [0], [1], [0, 0, 1, 1], [], []>} : vector<16x640xf32>, vector<640x128xf32>, vector<16x128xf32> -> vector<16x128xf32>
    %c808 = arith.constant 808 : index
    %c0_37 = arith.constant 0 : index
    %155 = vector.load %arg1[%c808, %c0_37] : memref<952x128xf32, #tpu.memory_space<vmem>>, vector<1x128xf32>
    %156 = vector.broadcast %155 : vector<1x128xf32> to vector<16x128xf32>
    %157 = arith.addf %154, %156 : vector<16x128xf32>
    %cst_38 = arith.constant 0.000000e+00 : f32
    %158 = vector.broadcast %cst_38 : f32 to vector<16x128xf32>
    %159 = arith.cmpf ogt, %157, %158 : vector<16x128xf32>
    %cst_39 = arith.constant 0.000000e+00 : f32
    %160 = vector.broadcast %cst_39 : f32 to vector<16x128xf32>
    %161 = arith.minimumf %157, %160 : vector<16x128xf32>
    %162 = math.exp %161 : vector<16x128xf32>
    %cst_40 = arith.constant 1.000000e+00 : f32
    %163 = vector.broadcast %cst_40 : f32 to vector<16x128xf32>
    %164 = arith.subf %162, %163 : vector<16x128xf32>
    %165 = arith.select %159, %157, %164 : vector<16x128xi1>, vector<16x128xf32>
    %c816 = arith.constant 816 : index
    %c0_41 = arith.constant 0 : index
    %166 = vector.load %arg1[%c816, %c0_41] : memref<952x128xf32, #tpu.memory_space<vmem>>, vector<128x128xf32>
    %cst_42 = arith.constant dense<0.000000e+00> : vector<16x128xf32>
    %167 = tpu.matmul %165, %166, %cst_42 {dimension_numbers = #tpu.dot_dimension_numbers<[1], [0], [0], [1], [0, 0, 1, 1], [], []>} : vector<16x128xf32>, vector<128x128xf32>, vector<16x128xf32> -> vector<16x128xf32>
    %c944 = arith.constant 944 : index
    %c0_43 = arith.constant 0 : index
    %168 = vector.load %arg1[%c944, %c0_43] : memref<952x128xf32, #tpu.memory_space<vmem>>, vector<1x128xf32>
    %169 = vector.broadcast %168 : vector<1x128xf32> to vector<16x128xf32>
    %170 = arith.addf %167, %169 : vector<16x128xf32>
    %171 = vector.extract_strided_slice %170 {offsets = [0, 0], sizes = [16, 4], strides = [1, 1]} : vector<16x128xf32> to vector<16x4xf32>
    %cst_44 = arith.constant 0.000000e+00 : f32
    %172 = vector.broadcast %cst_44 : f32 to vector<16x4xf32>
    %173 = arith.cmpf ogt, %171, %172 : vector<16x4xf32>
    %cst_45 = arith.constant 0.000000e+00 : f32
    %174 = vector.broadcast %cst_45 : f32 to vector<16x4xf32>
    %175 = arith.minimumf %171, %174 : vector<16x4xf32>
    %176 = math.exp %175 : vector<16x4xf32>
    %cst_46 = arith.constant 1.000000e+00 : f32
    %177 = vector.broadcast %cst_46 : f32 to vector<16x4xf32>
    %178 = arith.subf %176, %177 : vector<16x4xf32>
    %179 = arith.select %173, %171, %178 : vector<16x4xi1>, vector<16x4xf32>
    %180 = vector.shape_cast %179 : vector<16x4xf32> to vector<1x16x4xf32>
    %cst_47 = arith.constant dense<0.000000e+00> : vector<1xf32>
    %181 = vector.multi_reduction <add>, %180, %cst_47 [1, 2] : vector<1x16x4xf32> to vector<1xf32>
    %182 = vector.shape_cast %181 : vector<1xf32> to vector<1x1x1xf32>
    %183 = vector.extract %182[0, 0, 0] : f32 from vector<1x1x1xf32>
    %184 = arith.mulf %179, %179 : vector<16x4xf32>
    %185 = vector.shape_cast %184 : vector<16x4xf32> to vector<1x16x4xf32>
    %cst_48 = arith.constant dense<0.000000e+00> : vector<1xf32>
    %186 = vector.multi_reduction <add>, %185, %cst_48 [1, 2] : vector<1x16x4xf32> to vector<1xf32>
    %187 = vector.shape_cast %186 : vector<1xf32> to vector<1x1x1xf32>
    %188 = vector.extract %187[0, 0, 0] : f32 from vector<1x1x1xf32>
    %cst_49 = arith.constant 6.400000e+01 : f32
    %189 = arith.divf %183, %cst_49 : f32
    %cst_50 = arith.constant 6.400000e+01 : f32
    %190 = arith.mulf %cst_50, %189 : f32
    %191 = arith.mulf %190, %189 : f32
    %192 = arith.subf %188, %191 : f32
    %cst_51 = arith.constant 6.300000e+01 : f32
    %193 = arith.divf %192, %cst_51 : f32
    %194 = vector.broadcast %189 : f32 to vector<16x4xf32>
    %195 = arith.subf %179, %194 : vector<16x4xf32>
    %196 = math.rsqrt %193 : f32
    %197 = vector.broadcast %196 : f32 to vector<16x4xf32>
    %198 = arith.mulf %195, %197 : vector<16x4xf32>
    %c0_52 = arith.constant 0 : index
    %c0_53 = arith.constant 0 : index
    %199 = vector.load %arg2[%c0_52, %c0_53] : memref<16x4xf32, #tpu.memory_space<vmem>>, vector<16x4xf32>
    tpu.vector_store %arg2[%c0_52, %c0_53], %198 {strides = array<i32>} : memref<16x4xf32, #tpu.memory_space<vmem>>, vector<16x4xf32>,
    return
  }
}

</mosaic_0001>

<llo_original>
// kernel: enc_turbofy_rate2_cnn.1
$region0: #{enc_turbofy_rate2_cnn.1}
  #allocation0 [shape = 'u32[]', space=smem, size = 0x4, offset = 0x4, fixed_abs, tag = 'smem constant byte address 0x4 - core index']
  #allocation1 [shape = 'u32[144,128]{1,0:T(1,128)}', space=vmem, size = 0x12000, scoped, tag = 'internal scratch']
  %s0 = inlined_call_operand.vmem [shape: f32[16,4], index: 0, kind: input, shape index: {}]
  %s1 = inlined_call_operand.vmem [shape: f32[952,128], index: 1, kind: input, shape index: {}]
  %s2 = inlined_call_operand.vmem [shape: f32[16,4], index: 2, kind: output, shape index: {}]
  %s3 = sld [smem:[#allocation0]]
  $region18: #{enc_turbofy_rate2_cnn.1} parent=0
    _
  %s5 = ssub.s32 1, %s3
  %s6 = scalar_select 0, %s5, %s3
  // Predicated region
  $region2: #{enc_turbofy_rate2_cnn.1} parent=0 // pred_check
    _
  $region3: #{enc_turbofy_rate2_cnn.1} parent=0 // pred_check_branch
    %8 = sbr.rel (0) target = $region5
  $region4: #{enc_turbofy_rate2_cnn.1} parent=0 // pred_region
    _
  $region5: #{enc_turbofy_rate2_cnn.1} parent=0 // pred_fallthru
    _
  // Predicated region
  $region6: #{enc_turbofy_rate2_cnn.1} parent=0 // pred_check
    _
  $region7: #{enc_turbofy_rate2_cnn.1} parent=0 // pred_check_branch
    %10 = sbr.rel (0) target = $region9
  $region8: #{enc_turbofy_rate2_cnn.1} parent=0 // pred_region
    _
  $region9: #{enc_turbofy_rate2_cnn.1} parent=0 // pred_fallthru
    _
  %v11 = vlaneseq
  %v12 = vshrl.u32 %v11, 7
  %v13 = vadd.s32 %v12, 8
  %vm14 = vcmp.ge.s32.totalorder %v12, 2
  %vm15 = vcmp.ge.s32.totalorder %v13, 2
  %vm16 = vcmp.lt.s32.totalorder %v12, 18
  %vm17 = vcmp.lt.s32.totalorder %v13, 18
  %vm18 = vmand %vm14, %vm16
  %vm19 = vmand %vm15, %vm17
  %v20 = vsel %vm18, 1, 0
  %v21 = vsel %vm19, 1, 0
  %v22 = vcvt.s32.f32 %v20
  %v23 = vcvt.s32.f32 %v21
  %vm24 = vcmp.ge.s32.totalorder %v12, 1
  %vm25 = vcmp.ge.s32.totalorder %v13, 1
  %vm26 = vcmp.lt.s32.totalorder %v12, 17
  %vm27 = vcmp.lt.s32.totalorder %v13, 17
  %vm28 = vmand %vm24, %vm26
  %vm29 = vmand %vm25, %vm27
  %v30 = vsel %vm28, 1, 0
  %v31 = vsel %vm29, 1, 0
  %v32 = vcvt.s32.f32 %v30
  %v33 = vcvt.s32.f32 %v31
  %vm34 = vcmp.ge.s32.totalorder %v12, 4294967295
  %vm35 = vcmp.ge.s32.totalorder %v13, 4294967295
  %vm36 = vcmp.lt.s32.totalorder %v12, 15
  %vm37 = vcmp.lt.s32.totalorder %v13, 15
  %vm38 = vmand %vm34, %vm36
  %vm39 = vmand %vm35, %vm37
  %v40 = vsel %vm38, 1, 0
  %v41 = vsel %vm39, 1, 0
  %v42 = vcvt.s32.f32 %v40
  %v43 = vcvt.s32.f32 %v41
  %vm44 = vcmp.ge.s32.totalorder %v12, 4294967294
  %vm45 = vcmp.ge.s32.totalorder %v13, 4294967294
  %vm46 = vcmp.lt.s32.totalorder %v12, 14
  %vm47 = vcmp.lt.s32.totalorder %v13, 14
  %vm48 = vmand %vm44, %vm46
  %vm49 = vmand %vm45, %vm47
  %v50 = vsel %vm48, 1, 0
  %v51 = vsel %vm49, 1, 0
  %v52 = vcvt.s32.f32 %v50
  %v53 = vcvt.s32.f32 %v51
  %v54 = vld [vmem:[%s0] sm:$0xff]
  %v55 = vld [vmem:[%s0 + $0x8] sm:$0xff]
  %v56 = vmul.f32 %v54, 2.0
  %v57 = vmul.f32 %v55, 2.0
  %v58 = vsub.f32 %v56, 1.0
  %v59 = vsub.f32 %v57, 1.0
  %61 = vset.pattern.permute.xlu0 0
  %62 = vperm.xlu0 %61, %v58
  %v63 = vpop.permute.xlu0 %62
  %66 = vset.pattern.permute.xlu0 0
  %67 = vperm.xlu0 %66, %v59
  %v68 = vpop.permute.xlu0 %67
  %70 = vset.pattern.permute.xlu0 1
  %71 = vperm.xlu0 %70, %v58
  %v72 = vpop.permute.xlu0 %71
  %74 = vset.pattern.permute.xlu0 1
  %75 = vperm.xlu0 %74, %v59
  %v76 = vpop.permute.xlu0 %75
  %78 = vset.pattern.permute.xlu0 2
  %79 = vperm.xlu0 %78, %v58
  %v80 = vpop.permute.xlu0 %79
  %82 = vset.pattern.permute.xlu0 2
  %83 = vperm.xlu0 %82, %v59
  %v84 = vpop.permute.xlu0 %83
  %86 = vset.pattern.permute.xlu0 3
  %87 = vperm.xlu0 %86, %v58
  %v88 = vpop.permute.xlu0 %87
  %90 = vset.pattern.permute.xlu0 3
  %91 = vperm.xlu0 %90, %v59
  %v92 = vpop.permute.xlu0 %91
  %v94 = vld [vmem:[%s1 + $0xa0] sm:$0x1]
  %v95 = vld [vmem:[%s1] sm:$0x1]
  %v96 = vlaneseq
  %v97 = vshrl.u32 %v96, 7
  %v98 = vsub.s32 0, %v97
  %v99 = vrot.slane %v95, %v98
  %v100 = vmul.f32 %v63, %v99
  %v101 = vmul.f32 %v68, %v99
  %v102 = vld [vmem:[%s1 + $0x8] sm:$0x1]
  %v103 = vlaneseq
  %v104 = vshrl.u32 %v103, 7
  %v105 = vsub.s32 0, %v104
  %v106 = vrot.slane %v102, %v105
  %v107 = vmul.f32 %v72, %v106
  %v108 = vmul.f32 %v76, %v106
  %v109 = vadd.f32 %v100, %v107
  %v110 = vadd.f32 %v101, %v108
  %v111 = vld [vmem:[%s1 + $0x10] sm:$0x1]
  %v112 = vlaneseq
  %v113 = vshrl.u32 %v112, 7
  %v114 = vsub.s32 0, %v113
  %v115 = vrot.slane %v111, %v114
  %v116 = vmul.f32 %v80, %v115
  %v117 = vmul.f32 %v84, %v115
  %v118 = vadd.f32 %v109, %v116
  %v119 = vadd.f32 %v110, %v117
  %v120 = vld [vmem:[%s1 + $0x18] sm:$0x1]
  %v121 = vlaneseq
  %v122 = vshrl.u32 %v121, 7
  %v123 = vsub.s32 0, %v122
  %v124 = vrot.slane %v120, %v123
  %v125 = vmul.f32 %v88, %v124
  %v126 = vmul.f32 %v92, %v124
  %v127 = vadd.f32 %v118, %v125
  %v128 = vadd.f32 %v119, %v126
  %v129 = vrot.slane %v127, 6
  %v130 = vrot.slane %v128, 6
  %vm131 = vcmp.lt.s32.totalorder %v12, 2
  %v132 = vsel %vm131, %v129, %v130
  %v133 = vsel %vm131, %v130, %v129
  %v134 = vmul.f32 %v133, %v22
  %v135 = vmul.f32 %v132, %v23
  %v136 = vlaneseq
  %v137 = vshrl.u32 %v136, 7
  %v138 = vsub.s32 0, %v137
  %v139 = vrot.slane %v94, %v138
  %v140 = vadd.f32 %v139, %v134
  %v141 = vadd.f32 %v139, %v135
  %v142 = vld [vmem:[%s1 + $0x20] sm:$0x1]
  %v143 = vlaneseq
  %v144 = vshrl.u32 %v143, 7
  %v145 = vsub.s32 0, %v144
  %v146 = vrot.slane %v142, %v145
  %v147 = vmul.f32 %v63, %v146
  %v148 = vmul.f32 %v68, %v146
  %v149 = vld [vmem:[%s1 + $0x28] sm:$0x1]
  %v150 = vlaneseq
  %v151 = vshrl.u32 %v150, 7
  %v152 = vsub.s32 0, %v151
  %v153 = vrot.slane %v149, %v152
  %v154 = vmul.f32 %v72, %v153
  %v155 = vmul.f32 %v76, %v153
  %v156 = vadd.f32 %v147, %v154
  %v157 = vadd.f32 %v148, %v155
  %v158 = vld [vmem:[%s1 + $0x30] sm:$0x1]
  %v159 = vlaneseq
  %v160 = vshrl.u32 %v159, 7
  %v161 = vsub.s32 0, %v160
  %v162 = vrot.slane %v158, %v161
  %v163 = vmul.f32 %v80, %v162
  %v164 = vmul.f32 %v84, %v162
  %v165 = vadd.f32 %v156, %v163
  %v166 = vadd.f32 %v157, %v164
  %v167 = vld [vmem:[%s1 + $0x38] sm:$0x1]
  %v168 = vlaneseq
  %v169 = vshrl.u32 %v168, 7
  %v170 = vsub.s32 0, %v169
  %v171 = vrot.slane %v167, %v170
  %v172 = vmul.f32 %v88, %v171
  %v173 = vmul.f32 %v92, %v171
  %v174 = vadd.f32 %v165, %v172
  %v175 = vadd.f32 %v166, %v173
  %v176 = vrot.slane %v174, 7
  %v177 = vrot.slane %v175, 7
  %vm178 = vcmp.lt.s32.totalorder %v12, 1
  %v179 = vsel %vm178, %v176, %v177
  %v180 = vsel %vm178, %v177, %v176
  %v181 = vmul.f32 %v180, %v32
  %v182 = vmul.f32 %v179, %v33
  %v183 = vadd.f32 %v140, %v181
  %v184 = vadd.f32 %v141, %v182
  %v185 = vld [vmem:[%s1 + $0x40] sm:$0x1]
  %v186 = vlaneseq
  %v187 = vshrl.u32 %v186, 7
  %v188 = vsub.s32 0, %v187
  %v189 = vrot.slane %v185, %v188
  %v190 = vmul.f32 %v63, %v189
  %v191 = vmul.f32 %v68, %v189
  %v192 = vld [vmem:[%s1 + $0x48] sm:$0x1]
  %v193 = vlaneseq
  %v194 = vshrl.u32 %v193, 7
  %v195 = vsub.s32 0, %v194
  %v196 = vrot.slane %v192, %v195
  %v197 = vmul.f32 %v72, %v196
  %v198 = vmul.f32 %v76, %v196
  %v199 = vadd.f32 %v190, %v197
  %v200 = vadd.f32 %v191, %v198
  %v201 = vld [vmem:[%s1 + $0x50] sm:$0x1]
  %v202 = vlaneseq
  %v203 = vshrl.u32 %v202, 7
  %v204 = vsub.s32 0, %v203
  %v205 = vrot.slane %v201, %v204
  %v206 = vmul.f32 %v80, %v205
  %v207 = vmul.f32 %v84, %v205
  %v208 = vadd.f32 %v199, %v206
  %v209 = vadd.f32 %v200, %v207
  %v210 = vld [vmem:[%s1 + $0x58] sm:$0x1]
  %v211 = vlaneseq
  %v212 = vshrl.u32 %v211, 7
  %v213 = vsub.s32 0, %v212
  %v214 = vrot.slane %v210, %v213
  %v215 = vmul.f32 %v88, %v214
  %v216 = vmul.f32 %v92, %v214
  %v217 = vadd.f32 %v208, %v215
  %v218 = vadd.f32 %v209, %v216
  %v219 = vadd.f32 %v183, %v217
  %v220 = vadd.f32 %v184, %v218
  %v221 = vld [vmem:[%s1 + $0x60] sm:$0x1]
  %v222 = vlaneseq
  %v223 = vshrl.u32 %v222, 7
  %v224 = vsub.s32 0, %v223
  %v225 = vrot.slane %v221, %v224
  %v226 = vmul.f32 %v63, %v225
  %v227 = vmul.f32 %v68, %v225
  %v228 = vld [vmem:[%s1 + $0x68] sm:$0x1]
  %v229 = vlaneseq
  %v230 = vshrl.u32 %v229, 7
  %v231 = vsub.s32 0, %v230
  %v232 = vrot.slane %v228, %v231
  %v233 = vmul.f32 %v72, %v232
  %v234 = vmul.f32 %v76, %v232
  %v235 = vadd.f32 %v226, %v233
  %v236 = vadd.f32 %v227, %v234
  %v237 = vld [vmem:[%s1 + $0x70] sm:$0x1]
  %v238 = vlaneseq
  %v239 = vshrl.u32 %v238, 7
  %v240 = vsub.s32 0, %v239
  %v241 = vrot.slane %v237, %v240
  %v242 = vmul.f32 %v80, %v241
  %v243 = vmul.f32 %v84, %v241
  %v244 = vadd.f32 %v235, %v242
  %v245 = vadd.f32 %v236, %v243
  %v246 = vld [vmem:[%s1 + $0x78] sm:$0x1]
  %v247 = vlaneseq
  %v248 = vshrl.u32 %v247, 7
  %v249 = vsub.s32 0, %v248
  %v250 = vrot.slane %v246, %v249
  %v251 = vmul.f32 %v88, %v250
  %v252 = vmul.f32 %v92, %v250
  %v253 = vadd.f32 %v244, %v251
  %v254 = vadd.f32 %v245, %v252
  %v255 = vrot.slane %v253, 1
  %v256 = vrot.slane %v254, 1
  %vm257 = vcmp.lt.s32.totalorder %v12, 7
  %v258 = vsel %vm257, %v255, %v256
  %v259 = vsel %vm257, %v256, %v255
  %v260 = vmul.f32 %v258, %v42
  %v261 = vmul.f32 %v259, %v43
  %v262 = vadd.f32 %v219, %v260
  %v263 = vadd.f32 %v220, %v261
  %v264 = vld [vmem:[%s1 + $0x80] sm:$0x1]
  %v265 = vlaneseq
  %v266 = vshrl.u32 %v265, 7
  %v267 = vsub.s32 0, %v266
  %v268 = vrot.slane %v264, %v267
  %v269 = vmul.f32 %v63, %v268
  %v270 = vmul.f32 %v68, %v268
  %v271 = vld [vmem:[%s1 + $0x88] sm:$0x1]
  %v272 = vlaneseq
  %v273 = vshrl.u32 %v272, 7
  %v274 = vsub.s32 0, %v273
  %v275 = vrot.slane %v271, %v274
  %v276 = vmul.f32 %v72, %v275
  %v277 = vmul.f32 %v76, %v275
  %v278 = vadd.f32 %v269, %v276
  %v279 = vadd.f32 %v270, %v277
  %v280 = vld [vmem:[%s1 + $0x90] sm:$0x1]
  %v281 = vlaneseq
  %v282 = vshrl.u32 %v281, 7
  %v283 = vsub.s32 0, %v282
  %v284 = vrot.slane %v280, %v283
  %v285 = vmul.f32 %v80, %v284
  %v286 = vmul.f32 %v84, %v284
  %v287 = vadd.f32 %v278, %v285
  %v288 = vadd.f32 %v279, %v286
  %v289 = vld [vmem:[%s1 + $0x98] sm:$0x1]
  %v290 = vlaneseq
  %v291 = vshrl.u32 %v290, 7
  %v292 = vsub.s32 0, %v291
  %v293 = vrot.slane %v289, %v292
  %v294 = vmul.f32 %v88, %v293
  %v295 = vmul.f32 %v92, %v293
  %v296 = vadd.f32 %v287, %v294
  %v297 = vadd.f32 %v288, %v295
  %v298 = vrot.slane %v296, 2
  %v299 = vrot.slane %v297, 2
  %vm300 = vcmp.lt.s32.totalorder %v12, 6
  %v301 = vsel %vm300, %v298, %v299
  %v302 = vsel %vm300, %v299, %v298
  %v303 = vmul.f32 %v301, %v52
  %v304 = vmul.f32 %v302, %v53
  %v305 = vadd.f32 %v262, %v303
  %v306 = vadd.f32 %v263, %v304
  %vm307 = vcmp.gt.f32.partialorder %v305, 0.0
  %vm308 = vcmp.gt.f32.partialorder %v306, 0.0
  %v309 = vmin.f32 %v305, 0.0
  %v310 = vmin.f32 %v306, 0.0
  %v311 = vmul.f32 %v309, 1.442695
  %v312 = vpow.pop %v311
  %v313 = vmul.f32 %v310, 1.442695
  %v314 = vpow.pop %v313
  %v315 = vsub.f32 %v312, 1.0
  %v316 = vsub.f32 %v314, 1.0
  %v317 = vsel %vm307, %v305, %v315
  %v318 = vsel %vm308, %v306, %v316
  %v319 = vrot.slane %v317, 6
  %v320 = vrot.slane %v318, 6
  %v321 = vsel %vm131, %v319, %v320
  %v322 = vsel %vm131, %v320, %v319
  %v323 = vmul.f32 %v322, %v22
  %v324 = vmul.f32 %v321, %v23
  %v325 = vrot.slane %v317, 7
  %v326 = vrot.slane %v318, 7
  %v327 = vsel %vm178, %v325, %v326
  %v328 = vsel %vm178, %v326, %v325
  %v329 = vmul.f32 %v328, %v32
  %v330 = vmul.f32 %v327, %v33
  %v331 = vrot.slane %v317, 1
  %v332 = vrot.slane %v318, 1
  %v333 = vsel %vm257, %v331, %v332
  %v334 = vsel %vm257, %v332, %v331
  %v335 = vmul.f32 %v333, %v42
  %v336 = vmul.f32 %v334, %v43
  %v337 = vrot.slane %v317, 2
  %v338 = vrot.slane %v318, 2
  %v339 = vsel %vm300, %v337, %v338
  %v340 = vsel %vm300, %v338, %v337
  %v341 = vmul.f32 %v339, %v52
  %v342 = vmul.f32 %v340, %v53
  %v343 = vld [vmem:[%s1 + $0xa8] sm:$0xff]
  %v344 = vld [vmem:[%s1 + $0xb0] sm:$0xff]
  %v345 = vld [vmem:[%s1 + $0xb8] sm:$0xff]
  %v346 = vld [vmem:[%s1 + $0xc0] sm:$0xff]
  %v347 = vld [vmem:[%s1 + $0xc8] sm:$0xff]
  %v348 = vld [vmem:[%s1 + $0xd0] sm:$0xff]
  %v349 = vld [vmem:[%s1 + $0xd8] sm:$0xff]
  %v350 = vld [vmem:[%s1 + $0xe0] sm:$0xff]
  %v351 = vld [vmem:[%s1 + $0xe8] sm:$0xff]
  %v352 = vld [vmem:[%s1 + $0xf0] sm:$0xff]
  %v353 = vld [vmem:[%s1 + $0xf8] sm:$0xff]
  %v354 = vld [vmem:[%s1 + $0x100] sm:$0xff]
  %v355 = vld [vmem:[%s1 + $0x108] sm:$0xff]
  %v356 = vld [vmem:[%s1 + $0x110] sm:$0xff]
  %v357 = vld [vmem:[%s1 + $0x118] sm:$0xff]
  %v358 = vld [vmem:[%s1 + $0x120] sm:$0xff]
  %v359 = vld [vmem:[%s1 + $0x128] sm:$0xff]
  %v360 = vld [vmem:[%s1 + $0x130] sm:$0xff]
  %v361 = vld [vmem:[%s1 + $0x138] sm:$0xff]
  %v362 = vld [vmem:[%s1 + $0x140] sm:$0xff]
  %v363 = vld [vmem:[%s1 + $0x148] sm:$0xff]
  %v364 = vld [vmem:[%s1 + $0x150] sm:$0xff]
  %v365 = vld [vmem:[%s1 + $0x158] sm:$0xff]
  %v366 = vld [vmem:[%s1 + $0x160] sm:$0xff]
  %v367 = vld [vmem:[%s1 + $0x168] sm:$0xff]
  %v368 = vld [vmem:[%s1 + $0x170] sm:$0xff]
  %v369 = vld [vmem:[%s1 + $0x178] sm:$0xff]
  %v370 = vld [vmem:[%s1 + $0x180] sm:$0xff]
  %v371 = vld [vmem:[%s1 + $0x188] sm:$0xff]
  %v372 = vld [vmem:[%s1 + $0x190] sm:$0xff]
  %v373 = vld [vmem:[%s1 + $0x198] sm:$0xff]
  %v374 = vld [vmem:[%s1 + $0x1a0] sm:$0xff]
  %v375 = vld [vmem:[%s1 + $0x1a8] sm:$0xff]
  %v376 = vld [vmem:[%s1 + $0x1b0] sm:$0xff]
  %v377 = vld [vmem:[%s1 + $0x1b8] sm:$0xff]
  %v378 = vld [vmem:[%s1 + $0x1c0] sm:$0xff]
  %v379 = vld [vmem:[%s1 + $0x1c8] sm:$0xff]
  %v380 = vld [vmem:[%s1 + $0x1d0] sm:$0xff]
  %v381 = vld [vmem:[%s1 + $0x1d8] sm:$0xff]
  %v382 = vld [vmem:[%s1 + $0x1e0] sm:$0xff]
  %v383 = vld [vmem:[%s1 + $0x1e8] sm:$0xff]
  %v384 = vld [vmem:[%s1 + $0x1f0] sm:$0xff]
  %v385 = vld [vmem:[%s1 + $0x1f8] sm:$0xff]
  %v386 = vld [vmem:[%s1 + $0x200] sm:$0xff]
  %v387 = vld [vmem:[%s1 + $0x208] sm:$0xff]
  %v388 = vld [vmem:[%s1 + $0x210] sm:$0xff]
  %v389 = vld [vmem:[%s1 + $0x218] sm:$0xff]
  %v390 = vld [vmem:[%s1 + $0x220] sm:$0xff]
  %v391 = vld [vmem:[%s1 + $0x228] sm:$0xff]
  %v392 = vld [vmem:[%s1 + $0x230] sm:$0xff]
  %v393 = vld [vmem:[%s1 + $0x238] sm:$0xff]
  %v394 = vld [vmem:[%s1 + $0x240] sm:$0xff]
  %v395 = vld [vmem:[%s1 + $0x248] sm:$0xff]
  %v396 = vld [vmem:[%s1 + $0x250] sm:$0xff]
  %v397 = vld [vmem:[%s1 + $0x258] sm:$0xff]
  %v398 = vld [vmem:[%s1 + $0x260] sm:$0xff]
  %v399 = vld [vmem:[%s1 + $0x268] sm:$0xff]
  %v400 = vld [vmem:[%s1 + $0x270] sm:$0xff]
  %v401 = vld [vmem:[%s1 + $0x278] sm:$0xff]
  %v402 = vld [vmem:[%s1 + $0x280] sm:$0xff]
  %v403 = vld [vmem:[%s1 + $0x288] sm:$0xff]
  %v404 = vld [vmem:[%s1 + $0x290] sm:$0xff]
  %v405 = vld [vmem:[%s1 + $0x298] sm:$0xff]
  %v406 = vld [vmem:[%s1 + $0x2a0] sm:$0xff]
  %v407 = vld [vmem:[%s1 + $0x2a8] sm:$0xff]
  %v408 = vld [vmem:[%s1 + $0x2b0] sm:$0xff]
  %v409 = vld [vmem:[%s1 + $0x2b8] sm:$0xff]
  %v410 = vld [vmem:[%s1 + $0x2c0] sm:$0xff]
  %v411 = vld [vmem:[%s1 + $0x2c8] sm:$0xff]
  %v412 = vld [vmem:[%s1 + $0x2d0] sm:$0xff]
  %v413 = vld [vmem:[%s1 + $0x2d8] sm:$0xff]
  %v414 = vld [vmem:[%s1 + $0x2e0] sm:$0xff]
  %v415 = vld [vmem:[%s1 + $0x2e8] sm:$0xff]
  %v416 = vld [vmem:[%s1 + $0x2f0] sm:$0xff]
  %v417 = vld [vmem:[%s1 + $0x2f8] sm:$0xff]
  %v418 = vld [vmem:[%s1 + $0x300] sm:$0xff]
  %v419 = vld [vmem:[%s1 + $0x308] sm:$0xff]
  %v420 = vld [vmem:[%s1 + $0x310] sm:$0xff]
  %v421 = vld [vmem:[%s1 + $0x318] sm:$0xff]
  %v422 = vld [vmem:[%s1 + $0x320] sm:$0xff]
  %v423 = vld [vmem:[%s1 + $0x328] sm:$0x1]
  %v424 = vlaneseq
  %v425 = vshrl.u32 %v424, 7
  %v426 = vsub.s32 0, %v425
  %v427 = vrot.slane %v423, %v426
  %428 = vmatprep.subr.mxu0 0.0
  %429 = vmatpush1.msra.mxu0 %v343
  %430 = vmatprep.subr.mxu0 0.0
  %431 = vmatpush1.msra.mxu0 %v344
  %432 = vmatprep.subr.mxu0 0.0
  %433 = vmatpush1.msra.mxu0 %v345
  %434 = vmatprep.subr.mxu0 0.0
  %435 = vmatpush1.msra.mxu0 %v346
  %436 = vmatprep.subr.mxu0 0.0
  %437 = vmatpush1.msra.mxu0 %v347
  %438 = vmatprep.subr.mxu0 0.0
  %439 = vmatpush1.msra.mxu0 %v348
  %440 = vmatprep.subr.mxu0 0.0
  %441 = vmatpush1.msra.mxu0 %v349
  %442 = vmatprep.subr.mxu0 0.0
  %443 = vmatpush1.msra.mxu0 %v350
  %444 = vmatprep.subr.mxu0 0.0
  %445 = vmatpush1.msra.mxu0 %v351
  %446 = vmatprep.subr.mxu0 0.0
  %447 = vmatpush1.msra.mxu0 %v352
  %448 = vmatprep.subr.mxu0 0.0
  %449 = vmatpush1.msra.mxu0 %v353
  %450 = vmatprep.subr.mxu0 0.0
  %451 = vmatpush1.msra.mxu0 %v354
  %452 = vmatprep.subr.mxu0 0.0
  %453 = vmatpush1.msra.mxu0 %v355
  %454 = vmatprep.subr.mxu0 0.0
  %455 = vmatpush1.msra.mxu0 %v356
  %456 = vmatprep.subr.mxu0 0.0
  %457 = vmatpush1.msra.mxu0 %v357
  %458 = vmatprep.subr.mxu0 0.0
  %459 = vmatpush1.msra.mxu0 %v358
  %460 = vmatprep.subr.mxu0 0.0
  %461 = vmatpush1.msra.mxu0 %v359
  %462 = vmatprep.subr.mxu0 0.0
  %463 = vmatpush1.msra.mxu0 %v360
  %464 = vmatprep.subr.mxu0 0.0
  %465 = vmatpush1.msra.mxu0 %v361
  %466 = vmatprep.subr.mxu0 0.0
  %467 = vmatpush1.msra.mxu0 %v362
  %468 = vmatprep.subr.mxu0 0.0
  %469 = vmatpush1.msra.mxu0 %v363
  %470 = vmatprep.subr.mxu0 0.0
  %471 = vmatpush1.msra.mxu0 %v364
  %472 = vmatprep.subr.mxu0 0.0
  %473 = vmatpush1.msra.mxu0 %v365
  %474 = vmatprep.subr.mxu0 0.0
  %475 = vmatpush1.msra.mxu0 %v366
  %476 = vmatprep.subr.mxu0 0.0
  %477 = vmatpush1.msra.mxu0 %v367
  %478 = vmatprep.subr.mxu0 0.0
  %479 = vmatpush1.msra.mxu0 %v368
  %480 = vmatprep.subr.mxu0 0.0
  %481 = vmatpush1.msra.mxu0 %v369
  %482 = vmatprep.subr.mxu0 0.0
  %483 = vmatpush1.msra.mxu0 %v370
  %484 = vmatprep.subr.mxu0 0.0
  %485 = vmatpush1.msra.mxu0 %v371
  %486 = vmatprep.subr.mxu0 0.0
  %487 = vmatpush1.msra.mxu0 %v372
  %488 = vmatprep.subr.mxu0 0.0
  %489 = vmatpush1.msra.mxu0 %v373
  %490 = vmatprep.subr.mxu0 0.0
  %491 = vmatpush1.msra.mxu0 %v374
  %492 = vmatprep.mubr.f32.mxu0 %v329
  %493 = vmatmul.mubr.f32.gmra.mrb[0].mxu0 %v323
  %v494 = vpop.f32.mrb[0].mxu0
  %v495 = vadd.f32 %v427, %v494
  %v496 = vpop.f32.mrb[0].mxu0
  %497 = vmatprep.mubr.f32.mxu0 %v330
  %498 = vmatmul.mubr.f32.gmra.mrb[0].mxu0 %v324
  %v499 = vpop.f32.mrb[0].mxu0
  %v500 = vadd.f32 %v427, %v499
  %v501 = vpop.f32.mrb[0].mxu0
  %502 = vdwg.mxu0
  %503 = vmatprep.subr.mxu0 0.0
  %504 = vmatpush1.msra.mxu0 %v375
  %505 = vmatprep.subr.mxu0 0.0
  %506 = vmatpush1.msra.mxu0 %v376
  %507 = vmatprep.subr.mxu0 0.0
  %508 = vmatpush1.msra.mxu0 %v377
  %509 = vmatprep.subr.mxu0 0.0
  %510 = vmatpush1.msra.mxu0 %v378
  %511 = vmatprep.subr.mxu0 0.0
  %512 = vmatpush1.msra.mxu0 %v379
  %513 = vmatprep.subr.mxu0 0.0
  %514 = vmatpush1.msra.mxu0 %v380
  %515 = vmatprep.subr.mxu0 0.0
  %516 = vmatpush1.msra.mxu0 %v381
  %517 = vmatprep.subr.mxu0 0.0
  %518 = vmatpush1.msra.mxu0 %v382
  %519 = vmatprep.subr.mxu0 0.0
  %520 = vmatpush1.msra.mxu0 %v383
  %521 = vmatprep.subr.mxu0 0.0
  %522 = vmatpush1.msra.mxu0 %v384
  %523 = vmatprep.subr.mxu0 0.0
  %524 = vmatpush1.msra.mxu0 %v385
  %525 = vmatprep.subr.mxu0 0.0
  %526 = vmatpush1.msra.mxu0 %v386
  %527 = vmatprep.subr.mxu0 0.0
  %528 = vmatpush1.msra.mxu0 %v387
  %529 = vmatprep.subr.mxu0 0.0
  %530 = vmatpush1.msra.mxu0 %v388
  %531 = vmatprep.subr.mxu0 0.0
  %532 = vmatpush1.msra.mxu0 %v389
  %533 = vmatprep.subr.mxu0 0.0
  %534 = vmatpush1.msra.mxu0 %v390
  %535 = vmatprep.subr.mxu0 0.0
  %536 = vmatpush1.msra.mxu0 %v391
  %537 = vmatprep.subr.mxu0 0.0
  %538 = vmatpush1.msra.mxu0 %v392
  %539 = vmatprep.subr.mxu0 0.0
  %540 = vmatpush1.msra.mxu0 %v393
  %541 = vmatprep.subr.mxu0 0.0
  %542 = vmatpush1.msra.mxu0 %v394
  %543 = vmatprep.subr.mxu0 0.0
  %544 = vmatpush1.msra.mxu0 %v395
  %545 = vmatprep.subr.mxu0 0.0
  %546 = vmatpush1.msra.mxu0 %v396
  %547 = vmatprep.subr.mxu0 0.0
  %548 = vmatpush1.msra.mxu0 %v397
  %549 = vmatprep.subr.mxu0 0.0
  %550 = vmatpush1.msra.mxu0 %v398
  %551 = vmatprep.subr.mxu0 0.0
  %552 = vmatpush1.msra.mxu0 %v399
  %553 = vmatprep.subr.mxu0 0.0
  %554 = vmatpush1.msra.mxu0 %v400
  %555 = vmatprep.subr.mxu0 0.0
  %556 = vmatpush1.msra.mxu0 %v401
  %557 = vmatprep.subr.mxu0 0.0
  %558 = vmatpush1.msra.mxu0 %v402
  %559 = vmatprep.subr.mxu0 0.0
  %560 = vmatpush1.msra.mxu0 %v403
  %561 = vmatprep.subr.mxu0 0.0
  %562 = vmatpush1.msra.mxu0 %v404
  %563 = vmatprep.subr.mxu0 0.0
  %564 = vmatpush1.msra.mxu0 %v405
  %565 = vmatprep.subr.mxu0 0.0
  %566 = vmatpush1.msra.mxu0 %v406
  %567 = vmatprep.mubr.f32.mxu0 %v335
  %568 = vmatmul.mubr.f32.gmra.mrb[0].mxu0 %v317
  %v569 = vpop.f32.mrb[0].mxu0
  %v570 = vadd.f32 %v495, %v569
  %v571 = vpop.f32.mrb[0].mxu0
  %572 = vmatprep.mubr.f32.mxu0 %v336
  %573 = vmatmul.mubr.f32.gmra.mrb[0].mxu0 %v318
  %v574 = vpop.f32.mrb[0].mxu0
  %v575 = vadd.f32 %v500, %v574
  %v576 = vpop.f32.mrb[0].mxu0
  %577 = vdwg.mxu0
  %578 = vmatprep.subr.mxu0 0.0
  %579 = vmatpush1.msra.mxu0 %v407
  %580 = vmatprep.subr.mxu0 0.0
  %581 = vmatpush1.msra.mxu0 %v408
  %582 = vmatprep.subr.mxu0 0.0
  %583 = vmatpush1.msra.mxu0 %v409
  %584 = vmatprep.subr.mxu0 0.0
  %585 = vmatpush1.msra.mxu0 %v410
  %586 = vmatprep.subr.mxu0 0.0
  %587 = vmatpush1.msra.mxu0 %v411
  %588 = vmatprep.subr.mxu0 0.0
  %589 = vmatpush1.msra.mxu0 %v412
  %590 = vmatprep.subr.mxu0 0.0
  %591 = vmatpush1.msra.mxu0 %v413
  %592 = vmatprep.subr.mxu0 0.0
  %593 = vmatpush1.msra.mxu0 %v414
  %594 = vmatprep.subr.mxu0 0.0
  %595 = vmatpush1.msra.mxu0 %v415
  %596 = vmatprep.subr.mxu0 0.0
  %597 = vmatpush1.msra.mxu0 %v416
  %598 = vmatprep.subr.mxu0 0.0
  %599 = vmatpush1.msra.mxu0 %v417
  %600 = vmatprep.subr.mxu0 0.0
  %601 = vmatpush1.msra.mxu0 %v418
  %602 = vmatprep.subr.mxu0 0.0
  %603 = vmatpush1.msra.mxu0 %v419
  %604 = vmatprep.subr.mxu0 0.0
  %605 = vmatpush1.msra.mxu0 %v420
  %606 = vmatprep.subr.mxu0 0.0
  %607 = vmatpush1.msra.mxu0 %v421
  %608 = vmatprep.subr.mxu0 0.0
  %609 = vmatpush1.msra.mxu0 %v422
  %610 = vmatprep.subr.mxu0 0.0
  %611 = vmatpush1.msra.mxu0 0.0
  %612 = vmatprep.subr.mxu0 0.0
  %613 = vmatpush1.msra.mxu0 0.0
  %614 = vmatprep.subr.mxu0 0.0
  %615 = vmatpush1.msra.mxu0 0.0
  %616 = vmatprep.subr.mxu0 0.0
  %617 = vmatpush1.msra.mxu0 0.0
  %618 = vmatprep.subr.mxu0 0.0
  %619 = vmatpush1.msra.mxu0 0.0
  %620 = vmatprep.subr.mxu0 0.0
  %621 = vmatpush1.msra.mxu0 0.0
  %622 = vmatprep.subr.mxu0 0.0
  %623 = vmatpush1.msra.mxu0 0.0
  %624 = vmatprep.subr.mxu0 0.0
  %625 = vmatpush1.msra.mxu0 0.0
  %626 = vmatprep.subr.mxu0 0.0
  %627 = vmatpush1.msra.mxu0 0.0
  %628 = vmatprep.subr.mxu0 0.0
  %629 = vmatpush1.msra.mxu0 0.0
  %630 = vmatprep.subr.mxu0 0.0
  %631 = vmatpush1.msra.mxu0 0.0
  %632 = vmatprep.subr.mxu0 0.0
  %633 = vmatpush1.msra.mxu0 0.0
  %634 = vmatprep.subr.mxu0 0.0
  %635 = vmatpush1.msra.mxu0 0.0
  %636 = vmatprep.subr.mxu0 0.0
  %637 = vmatpush1.msra.mxu0 0.0
  %638 = vmatprep.subr.mxu0 0.0
  %639 = vmatpush1.msra.mxu0 0.0
  %640 = vmatprep.subr.mxu0 0.0
  %641 = vmatpush1.msra.mxu0 0.0
  %642 = vmatprep.mubr.f32.mxu0 0.0
  %643 = vmatmul.mubr.f32.gmra.mrb[0].mxu0 %v341
  %v644 = vpop.f32.mrb[0].mxu0
  %v645 = vadd.f32 %v570, %v644
  %v646 = vpop.f32.mrb[0].mxu0
  %647 = vmatprep.mubr.f32.mxu0 0.0
  %648 = vmatmul.mubr.f32.gmra.mrb[0].mxu0 %v342
  %v649 = vpop.f32.mrb[0].mxu0
  %v650 = vadd.f32 %v575, %v649
  %v651 = vpop.f32.mrb[0].mxu0
  %652 = vdwg.mxu0
  %vm653 = vcmp.gt.f32.partialorder %v645, 0.0
  %vm654 = vcmp.gt.f32.partialorder %v650, 0.0
  %v655 = vmin.f32 %v645, 0.0
  %v656 = vmin.f32 %v650, 0.0
  %v657 = vmul.f32 %v655, 1.442695
  %v658 = vpow.pop %v657
  %v659 = vmul.f32 %v656, 1.442695
  %v660 = vpow.pop %v659
  %v661 = vsub.f32 %v658, 1.0
  %v662 = vsub.f32 %v660, 1.0
  %v663 = vsel %vm653, %v645, %v661
  %v664 = vsel %vm654, %v650, %v662
  %v665 = vld [vmem:[%s1 + $0x330] sm:$0xff]
  %v666 = vld [vmem:[%s1 + $0x338] sm:$0xff]
  %v667 = vld [vmem:[%s1 + $0x340] sm:$0xff]
  %v668 = vld [vmem:[%s1 + $0x348] sm:$0xff]
  %v669 = vld [vmem:[%s1 + $0x350] sm:$0xff]
  %v670 = vld [vmem:[%s1 + $0x358] sm:$0xff]
  %v671 = vld [vmem:[%s1 + $0x360] sm:$0xff]
  %v672 = vld [vmem:[%s1 + $0x368] sm:$0xff]
  %v673 = vld [vmem:[%s1 + $0x370] sm:$0xff]
  %v674 = vld [vmem:[%s1 + $0x378] sm:$0xff]
  %v675 = vld [vmem:[%s1 + $0x380] sm:$0xff]
  %v676 = vld [vmem:[%s1 + $0x388] sm:$0xff]
  %v677 = vld [vmem:[%s1 + $0x390] sm:$0xff]
  %v678 = vld [vmem:[%s1 + $0x398] sm:$0xff]
  %v679 = vld [vmem:[%s1 + $0x3a0] sm:$0xff]
  %v680 = vld [vmem:[%s1 + $0x3a8] sm:$0xff]
  %v681 = vld [vmem:[%s1 + $0x3b0] sm:$0x1]
  %v682 = vlaneseq
  %v683 = vshrl.u32 %v682, 7
  %v684 = vsub.s32 0, %v683
  %v685 = vrot.slane %v681, %v684
  %686 = vmatprep.subr.mxu0 0.0
  %687 = vmatpush1.msra.mxu0 %v665
  %688 = vmatprep.subr.mxu0 0.0
  %689 = vmatpush1.msra.mxu0 %v666
  %690 = vmatprep.subr.mxu0 0.0
  %691 = vmatpush1.msra.mxu0 %v667
  %692 = vmatprep.subr.mxu0 0.0
  %693 = vmatpush1.msra.mxu0 %v668
  %694 = vmatprep.subr.mxu0 0.0
  %695 = vmatpush1.msra.mxu0 %v669
  %696 = vmatprep.subr.mxu0 0.0
  %697 = vmatpush1.msra.mxu0 %v670
  %698 = vmatprep.subr.mxu0 0.0
  %699 = vmatpush1.msra.mxu0 %v671
  %700 = vmatprep.subr.mxu0 0.0
  %701 = vmatpush1.msra.mxu0 %v672
  %702 = vmatprep.subr.mxu0 0.0
  %703 = vmatpush1.msra.mxu0 %v673
  %704 = vmatprep.subr.mxu0 0.0
  %705 = vmatpush1.msra.mxu0 %v674
  %706 = vmatprep.subr.mxu0 0.0
  %707 = vmatpush1.msra.mxu0 %v675
  %708 = vmatprep.subr.mxu0 0.0
  %709 = vmatpush1.msra.mxu0 %v676
  %710 = vmatprep.subr.mxu0 0.0
  %711 = vmatpush1.msra.mxu0 %v677
  %712 = vmatprep.subr.mxu0 0.0
  %713 = vmatpush1.msra.mxu0 %v678
  %714 = vmatprep.subr.mxu0 0.0
  %715 = vmatpush1.msra.mxu0 %v679
  %716 = vmatprep.subr.mxu0 0.0
  %717 = vmatpush1.msra.mxu0 %v680
  %718 = vmatprep.subr.mxu0 0.0
  %719 = vmatpush1.msra.mxu0 0.0
  %720 = vmatprep.subr.mxu0 0.0
  %721 = vmatpush1.msra.mxu0 0.0
  %722 = vmatprep.subr.mxu0 0.0
  %723 = vmatpush1.msra.mxu0 0.0
  %724 = vmatprep.subr.mxu0 0.0
  %725 = vmatpush1.msra.mxu0 0.0
  %726 = vmatprep.subr.mxu0 0.0
  %727 = vmatpush1.msra.mxu0 0.0
  %728 = vmatprep.subr.mxu0 0.0
  %729 = vmatpush1.msra.mxu0 0.0
  %730 = vmatprep.subr.mxu0 0.0
  %731 = vmatpush1.msra.mxu0 0.0
  %732 = vmatprep.subr.mxu0 0.0
  %733 = vmatpush1.msra.mxu0 0.0
  %734 = vmatprep.subr.mxu0 0.0
  %735 = vmatpush1.msra.mxu0 0.0
  %736 = vmatprep.subr.mxu0 0.0
  %737 = vmatpush1.msra.mxu0 0.0
  %738 = vmatprep.subr.mxu0 0.0
  %739 = vmatpush1.msra.mxu0 0.0
  %740 = vmatprep.subr.mxu0 0.0
  %741 = vmatpush1.msra.mxu0 0.0
  %742 = vmatprep.subr.mxu0 0.0
  %743 = vmatpush1.msra.mxu0 0.0
  %744 = vmatprep.subr.mxu0 0.0
  %745 = vmatpush1.msra.mxu0 0.0
  %746 = vmatprep.subr.mxu0 0.0
  %747 = vmatpush1.msra.mxu0 0.0
  %748 = vmatprep.subr.mxu0 0.0
  %749 = vmatpush1.msra.mxu0 0.0
  %750 = vmatprep.mubr.f32.mxu0 0.0
  %751 = vmatmul.mubr.f32.gmra.mrb[0].mxu0 %v663
  %v752 = vpop.f32.mrb[0].mxu0
  %v753 = vadd.f32 %v685, %v752
  %v754 = vpop.f32.mrb[0].mxu0
  %755 = vmatprep.mubr.f32.mxu0 0.0
  %756 = vmatmul.mubr.f32.gmra.mrb[0].mxu0 %v664
  %v757 = vpop.f32.mrb[0].mxu0
  %v758 = vadd.f32 %v685, %v757
  %v759 = vpop.f32.mrb[0].mxu0
  %760 = vdwg.mxu0
  %vm761 = vcmp.gt.f32.partialorder %v753, 0.0
  %vm762 = vcmp.gt.f32.partialorder %v758, 0.0
  %v763 = vmin.f32 %v753, 0.0
  %v764 = vmin.f32 %v758, 0.0
  %v765 = vmul.f32 %v763, 1.442695
  %v766 = vpow.pop %v765
  %v767 = vmul.f32 %v764, 1.442695
  %v768 = vpow.pop %v767
  %v769 = vsub.f32 %v766, 1.0
  %v770 = vsub.f32 %v768, 1.0
  %v771 = vsel %vm761, %v753, %v769
  %v772 = vsel %vm762, %v758, %v770
  %vm773 = vcmask 31744
  %v774 = vsel %vm773, %v771, 0.0
  %v775 = vsel %vm773, %v772, 0.0
  %v776 = vadd.f32 %v774, %v775
  %777 = vadd.xlane.f32.xlu0 %v776
  %v778 = vpop.xlane.xlu0 %777
  %v779 = vrot.slane %v778, 4
  %v780 = vadd.f32 %v778, %v779
  %v781 = vrot.slane %v780, 2
  %v782 = vadd.f32 %v780, %v781
  %v783 = vrot.slane %v782, 1
  %v784 = vadd.f32 %v782, %v783
  %s785 = vtos %v784
  %v786 = vmul.f32 %v771, %v771
  %v787 = vmul.f32 %v772, %v772
  %v788 = vsel %vm773, %v786, 0.0
  %v789 = vsel %vm773, %v787, 0.0
  %v790 = vadd.f32 %v788, %v789
  %791 = vadd.xlane.f32.xlu0 %v790
  %v792 = vpop.xlane.xlu0 %791
  %v793 = vrot.slane %v792, 4
  %v794 = vadd.f32 %v792, %v793
  %v795 = vrot.slane %v794, 2
  %v796 = vadd.f32 %v794, %v795
  %v797 = vrot.slane %v796, 1
  %v798 = vadd.f32 %v796, %v797
  %s799 = vtos %v798
  %v800 = vrcp.pop 64.0
  %s801 = vtos %v800
  %s802 = smul.f32 %s785, %s801
  %s803 = smul.f32 %s802, 64.0
  %s804 = smul.f32 %s803, %s802
  %s805 = ssub.f32 %s799, %s804
  %v806 = vrcp.pop 63.0
  %s807 = vtos %v806
  %s808 = smul.f32 %s805, %s807
  %v809 = vstv %s802
  %v810 = vsub.f32 %v771, %v809
  %v811 = vsub.f32 %v772, %v809
  %v812 = vstv %s808
  %v813 = vrsqrt.pop %v812
  %s814 = vtos %v813
  %v815 = vstv %s814
  %v816 = vmul.f32 %v810, %v815
  %v817 = vmul.f32 %v811, %v815
  %818 = vst.msk [vmem:[%s2] sm:$0xff] %vm773, %v816
  %819 = vst.msk [vmem:[%s2 + $0x8] sm:$0xff] %vm773, %v817
  // Predicated region
  $region10: #{enc_turbofy_rate2_cnn.1} parent=0 // pred_check
    _
  $region11: #{enc_turbofy_rate2_cnn.1} parent=0 // pred_check_branch
    %821 = sbr.rel (0) target = $region13
  $region12: #{enc_turbofy_rate2_cnn.1} parent=0 // pred_region
    _
  $region13: #{enc_turbofy_rate2_cnn.1} parent=0 // pred_fallthru
    _
  // Predicated region
  $region14: #{enc_turbofy_rate2_cnn.1} parent=0 // pred_check
    _
  $region15: #{enc_turbofy_rate2_cnn.1} parent=0 // pred_check_branch
    %823 = sbr.rel (0) target = $region17
  $region16: #{enc_turbofy_rate2_cnn.1} parent=0 // pred_region
    _
  $region17: #{enc_turbofy_rate2_cnn.1} parent=0 // pred_fallthru
    _

</llo_original>
